<compile_context>
chip_gen: v5e
topology: v5e:2x2
jax: 0.10.0
libtpu: 0.0.40
codegen_flags: <defaults>
</compile_context>

<pallas_src>
import jax
import jax.numpy as jnp
from jax.experimental import pallas as pl
from jax.experimental.pallas import tpu as pltpu


def _round_up(v, m):
    return ((v + m - 1) // m) * m


def _tpu_vmem_bytes():
    """Per-TensorCore VMEM capacity; conservative 64 MiB fallback (v7x floor)."""
    try:
        cap = int(pltpu.get_tpu_info().vmem_capacity_bytes)
        # Clamp to a sane per-core range so a bogus report can't blow the budget.
        return max(64 << 20, min(cap, 128 << 20))
    except Exception:
        return 64 << 20


def _tpu_num_cores():
    """TensorCores per chip (megacore count); 1 if unknown (safe default)."""
    try:
        info = pltpu.get_tpu_info()
        for name in ("num_cores", "core_count", "num_tensorcores", "tensorcores_per_chip"):
            v = getattr(info, name, None)
            if v:
                return int(v)
    except Exception:
        pass
    return 1


def _make_residual_kernel(bb):
    """Kernel over a (bb, C, T) tile of x in (B, C, H*W) layout (spatial on lanes)."""

    def kernel(x_ref, w_ref, b_ref, o_ref):
        # w_ref: (C_out, C_in) resident pointwise (1x1 conv) weight.
        # b_ref: (C_out, 1) f32 bias, broadcast along the lane axis.
        w = w_ref[...]
        bias = b_ref[...]
        for i in range(bb):                                  # static unroll, bb <= 16
            x = x_ref[i]                                     # (C, T), native dtype
            y = jnp.dot(w, x, preferred_element_type=jnp.float32)   # MXU, f32 accumulate
            o_ref[i] = (x.astype(jnp.float32) + y + bias).astype(o_ref.dtype)

    return kernel


def residual_pointwise(x_nchw, w, b_col, *, donate_x=False):
    """forward(x) = x + conv1x1(x).

    x_nchw: (B, C, H, W);  w: (C_out, C_in) 1x1-conv weight;  b_col: (C_out, 1) f32.
    donate_x=True aliases x's HBM buffer with the output (only if x is not reused).
    """
    B, C, H, W = x_nchw.shape
    HW = H * W
    x = x_nchw.reshape(B, C, HW)            # free reshape, stays contiguous
    if w.dtype != x.dtype:                  # normally a no-op (cast done in __init__)
        w = w.astype(x.dtype)
    itemsize = x.dtype.itemsize

    # --- generation-aware tile sizing (kernel is purely HBM-bandwidth bound) ---
    vmem_cap = _tpu_vmem_bytes()                              # 64 MiB (v7x) / 128 MiB (v5e/v6e)
    vmem_soft = vmem_cap * 7 // 8                             # 56 / 112 MiB scoped limit
    target = max(8 << 20, min(16 << 20, vmem_cap // 8))       # 8 MiB (v7x) / 16 MiB (v5e/v6e)

    pack = max(8, 32 // max(1, itemsize))                     # sublane packing: 8 f32, 16 bf16, 32 i8
    padded_c = _round_up(C, pack)                             # physical (padded) channel rows

    # Lane-dense spatial tile: a multiple of 128 (or full HW when HW <= 128).
    if HW <= 128:
        T = int(HW)
    else:
        t = (target // max(1, padded_c * itemsize)) // 128 * 128
        T = int(max(128, min(t, (HW // 128) * 128)))

    # Fold a batch sub-block so small-spatial workloads still move multi-MiB blocks.
    per_batch = padded_c * T * itemsize
    Bb = int(max(1, min(B, 16, target // max(1, per_batch))))

    n_hw = pl.cdiv(HW, T)
    n_b = pl.cdiv(B, Bb)

    # Megacore (v7x): a 1-step grid leaves a TensorCore idle -> split the tile.
    if _tpu_num_cores() >= 2 and n_hw * n_b == 1:
        if HW > 128 and T > 128:
            T = max(128, _round_up(T // 2, 128))
            n_hw = pl.cdiv(HW, T)
        elif Bb >= 2:
            Bb = (Bb + 1) // 2
            n_b = pl.cdiv(B, Bb)

    # Sublane-padded VMEM accounting: 2x double-buffered input + 2x output + headroom.
    block_bytes = Bb * padded_c * T * itemsize
    vmem_limit = int(min(vmem_soft, max(32 << 20, 6 * block_bytes)))

    cost = pl.CostEstimate(
        flops=2 * B * HW * C * C + 2 * B * HW * C,            # matmul + bias/residual adds
        transcendentals=0,
        bytes_accessed=2 * B * C * HW * itemsize              # read x + write out
        + C * C * itemsize + C * 4,                           # weight + bias
    )

    # Larger grid axis first so megacore sharding always has >= 2 steps to split.
    if n_hw >= n_b:
        grid = (n_hw, n_b)
        xo_map = lambda j, i: (i, 0, j)
    else:
        grid = (n_b, n_hw)
        xo_map = lambda i, j: (i, 0, j)
    const_map = lambda *_: (0, 0)

    out = pl.pallas_call(
        _make_residual_kernel(Bb),
        out_shape=jax.ShapeDtypeStruct((B, C, HW), x_nchw.dtype),
        grid_spec=pltpu.PrefetchScalarGridSpec(
            num_scalar_prefetch=0,
            grid=grid,
            in_specs=[
                pl.BlockSpec((Bb, C, T), xo_map),
                pl.BlockSpec((C, C), const_map),
                pl.BlockSpec((C, 1), const_map),
            ],
            out_specs=pl.BlockSpec((Bb, C, T), xo_map),
        ),
        compiler_params=pltpu.CompilerParams(
            dimension_semantics=("parallel", "parallel"),
            vmem_limit_bytes=vmem_limit,
        ),
        cost_estimate=cost,
        input_output_aliases={0: 0} if donate_x else {},
    )(x, w, b_col)

    return out.reshape(B, C, H, W)


class Residual:
    """JAX mirror of the PyTorch Residual wrapper: forward(x) = x + module(x)."""

    def __init__(self, w, b, compute_dtype=None):
        w = jnp.asarray(w)
        # Store the weight in the compute dtype once (no per-call convert op).
        self.w = w if compute_dtype is None else w.astype(compute_dtype)
        self.b_col = jnp.asarray(b, jnp.float32).reshape(-1, 1)   # (C_out, 1) f32, once

    def __call__(self, x_nchw, *, donate_x=False):
        return residual_pointwise(x_nchw, self.w, self.b_col, donate_x=donate_x)


if __name__ == "__main__":
    key = jax.random.PRNGKey(0)
    kx, kw, kb = jax.random.split(key, 3)

    B, C, H, W = 2, 4, 16, 16
    x = jax.random.normal(kx, (B, C, H, W), dtype=jnp.float32)
    # Deterministic synthetic parameters of the wrapped 1x1-conv module.
    w = jax.random.normal(kw, (C, C), dtype=jnp.float32) * 0.1
    b = jax.random.normal(kb, (C,), dtype=jnp.float32) * 0.1

    mod = Residual(w, b, compute_dtype=x.dtype)
    out = jax.block_until_ready(mod(x))

    # Reference: x + conv1x1(x)  (NCHW, weight shape (out_c, in_c))
    ref = x + (jnp.einsum("bchw,oc->bohw", x, w) + b[None, :, None, None])
    assert out.shape == x.shape and out.dtype == x.dtype
    assert jnp.allclose(out, ref, atol=1e-5, rtol=1e-5)

    print("KERNEL_OK")
</pallas_src>

<mosaic_0001>
module attributes {stable_mosaic.version = 11 : i64} {
  func.func @kernel(%arg0: i32, %arg1: i32, %arg2: memref<2x4x256xf32, #tpu.memory_space<vmem>>, %arg3: memref<4x4xf32, #tpu.memory_space<vmem>>, %arg4: memref<4x1xf32, #tpu.memory_space<vmem>>, %arg5: memref<2x4x256xf32, #tpu.memory_space<vmem>>) attributes {dimension_semantics = [#tpu.dimension_semantics<parallel>, #tpu.dimension_semantics<parallel>], iteration_bounds = array<i64: 1, 1>, scalar_prefetch = 0 : i64, scratch_operands = 0 : i64, tpu.core_type = #tpu.core_type<tc>, window_params = [{transform_indices = @transform_0, window_bounds = array<i64: 2, 4, 256>}, {pipeline_mode = #tpu.pipeline_mode<synchronous>, transform_indices = @transform_1, window_bounds = array<i64: 4, 4>}, {pipeline_mode = #tpu.pipeline_mode<synchronous>, transform_indices = @transform_2, window_bounds = array<i64: 4, 1>}, {transform_indices = @transform_3, window_bounds = array<i64: 2, 4, 256>}]} {
    %c0 = arith.constant 0 : index
    %c0_0 = arith.constant 0 : index
    %0 = vector.load %arg3[%c0, %c0_0] : memref<4x4xf32, #tpu.memory_space<vmem>>, vector<4x4xf32>
    %c0_1 = arith.constant 0 : index
    %c0_2 = arith.constant 0 : index
    %1 = vector.load %arg4[%c0_1, %c0_2] : memref<4x1xf32, #tpu.memory_space<vmem>>, vector<4x1xf32>
    %c0_3 = arith.constant 0 : index
    %c0_4 = arith.constant 0 : index
    %c0_5 = arith.constant 0 : index
    %2 = vector.load %arg2[%c0_3, %c0_4, %c0_5] : memref<2x4x256xf32, #tpu.memory_space<vmem>>, vector<1x4x256xf32>
    %3 = vector.shape_cast %2 : vector<1x4x256xf32> to vector<4x256xf32>
    %cst = arith.constant dense<0.000000e+00> : vector<4x256xf32>
    %4 = tpu.matmul %0, %3, %cst {dimension_numbers = #tpu.dot_dimension_numbers<[1], [0], [0], [1], [0, 0, 1, 1], [], []>} : vector<4x4xf32>, vector<4x256xf32>, vector<4x256xf32> -> vector<4x256xf32>
    %5 = arith.addf %3, %4 : vector<4x256xf32>
    %6 = vector.broadcast %1 : vector<4x1xf32> to vector<4x256xf32>
    %7 = arith.addf %5, %6 : vector<4x256xf32>
    %c0_6 = arith.constant 0 : index
    %c0_7 = arith.constant 0 : index
    %c0_8 = arith.constant 0 : index
    %8 = vector.load %arg5[%c0_6, %c0_7, %c0_8] : memref<2x4x256xf32, #tpu.memory_space<vmem>>, vector<1x4x256xf32>
    %9 = vector.shape_cast %8 : vector<1x4x256xf32> to vector<4x256xf32>
    %10 = vector.shape_cast %7 : vector<4x256xf32> to vector<1x4x256xf32>
    tpu.vector_store %arg5[%c0_6, %c0_7, %c0_8], %10 {strides = array<i32>} : memref<2x4x256xf32, #tpu.memory_space<vmem>>, vector<1x4x256xf32>,
    %c1 = arith.constant 1 : index
    %c0_9 = arith.constant 0 : index
    %c0_10 = arith.constant 0 : index
    %11 = vector.load %arg2[%c1, %c0_9, %c0_10] : memref<2x4x256xf32, #tpu.memory_space<vmem>>, vector<1x4x256xf32>
    %12 = vector.shape_cast %11 : vector<1x4x256xf32> to vector<4x256xf32>
    %cst_11 = arith.constant dense<0.000000e+00> : vector<4x256xf32>
    %13 = tpu.matmul %0, %12, %cst_11 {dimension_numbers = #tpu.dot_dimension_numbers<[1], [0], [0], [1], [0, 0, 1, 1], [], []>} : vector<4x4xf32>, vector<4x256xf32>, vector<4x256xf32> -> vector<4x256xf32>
    %14 = arith.addf %12, %13 : vector<4x256xf32>
    %15 = vector.broadcast %1 : vector<4x1xf32> to vector<4x256xf32>
    %16 = arith.addf %14, %15 : vector<4x256xf32>
    %c1_12 = arith.constant 1 : index
    %c0_13 = arith.constant 0 : index
    %c0_14 = arith.constant 0 : index
    %17 = vector.load %arg5[%c1_12, %c0_13, %c0_14] : memref<2x4x256xf32, #tpu.memory_space<vmem>>, vector<1x4x256xf32>
    %18 = vector.shape_cast %17 : vector<1x4x256xf32> to vector<4x256xf32>
    %19 = vector.shape_cast %16 : vector<4x256xf32> to vector<1x4x256xf32>
    tpu.vector_store %arg5[%c1_12, %c0_13, %c0_14], %19 {strides = array<i32>} : memref<2x4x256xf32, #tpu.memory_space<vmem>>, vector<1x4x256xf32>,
    return
  }
  func.func @transform_0(%arg0: i32, %arg1: i32) -> (i32, i32, i32) {
    %c0_i32 = arith.constant 0 : i32
    %c0_i32_0 = arith.constant 0 : i32
    return %arg1, %c0_i32, %arg0 : i32, i32, i32
  }
  func.func @transform_1(%arg0: i32, %arg1: i32) -> (i32, i32) {
    %c0_i32 = arith.constant 0 : i32
    %c0_i32_0 = arith.constant 0 : i32
    %c0_i32_1 = arith.constant 0 : i32
    return %c0_i32, %c0_i32_0 : i32, i32
  }
  func.func @transform_2(%arg0: i32, %arg1: i32) -> (i32, i32) {
    %c0_i32 = arith.constant 0 : i32
    %c0_i32_0 = arith.constant 0 : i32
    %c0_i32_1 = arith.constant 0 : i32
    return %c0_i32, %c0_i32_0 : i32, i32
  }
  func.func @transform_3(%arg0: i32, %arg1: i32) -> (i32, i32, i32) {
    %c0_i32 = arith.constant 0 : i32
    %c0_i32_0 = arith.constant 0 : i32
    return %arg1, %c0_i32, %arg0 : i32, i32, i32
  }
}

</mosaic_0001>

<llo_original>
// kernel: tpu_custom_call.1
$region0: #{tpu_custom_call.1}
  #allocation0 [shape = 'u32[]', space=smem, size = 0x4, offset = 0x4, fixed_abs, tag = 'smem constant byte address 0x4 - core index']
  #allocation1 [shape = 'u32[72,128]{1,0:T(1,128)}', space=vmem, size = 0x9000, scoped, tag = 'internal scratch']
  %s0 = inlined_call_operand.hbm [shape: f32[2,4,256], index: 0, kind: input, shape index: {}]
  %s1 = inlined_call_operand.vmem [shape: f32[4,4], index: 1, kind: input, shape index: {}]
  %s2 = inlined_call_operand.vmem [shape: f32[4,1], index: 2, kind: input, shape index: {}]
  %s3 = inlined_call_operand.hbm [shape: f32[2,4,256], index: 3, kind: output, shape index: {}]
  %s4 = sld [smem:[#allocation0]]
  $region26: #{tpu_custom_call.1} parent=0
    _
  %s6 = ssub.s32 1, %s4
  %s7 = scalar_select 0, %s6, %s4
  $region1: #{tpu_custom_call.1} parent=0
    #allocation2 [shape = 'u8[8192]{0}', space=vmem, size = 0x2000, scoped, tag = 'input window, operand 0, single buffered']
    #allocation3 [shape = 's32[1]{0}', space=sflag, size = 0x4, scoped, tag = 'scoped memory for tpu_custom_call.1']
    #allocation4 [shape = 's32[1]{0}', space=sflag, size = 0x4, scoped, tag = 'scoped memory for tpu_custom_call.1']
    #allocation5 [shape = 'u8[8192]{0}', space=vmem, size = 0x2000, scoped, tag = 'output window, operand 0, single buffered']
    %8 = vsyncpa [#allocation3], 0
    %9 = vsyncpa [#allocation4], 0
    // Predicated region
    $region2: #{tpu_custom_call.1} parent=1 // pred_check
      _
    $region3: #{tpu_custom_call.1} parent=1 // pred_check_branch
      %11 = sbr.rel (0) target = $region5
    $region4: #{tpu_custom_call.1} parent=1 // pred_region
      %13 = vsyncadd [#allocation3], 0
      %s14 = sshll.u32 %s0, 4
      %s15 = int_to_ptr.hbm [resolvable:$true] %s14
      %s16 = sshll.u32 [#allocation2], 4
      %s17 = int_to_ptr.vmem [resolvable:$true] %s16
      %22 = dma.hbm_to_vmem [thread:$0]  %s15, 256, %s17, [#allocation3], 128, 128, 8
    $region5: #{tpu_custom_call.1} parent=1 // pred_fallthru
      _
    // Predicated region
    $region6: #{tpu_custom_call.1} parent=1 // pred_check
      _
    $region7: #{tpu_custom_call.1} parent=1 // pred_check_branch
      %24 = sbr.rel (0) target = $region9
    $region8: #{tpu_custom_call.1} parent=1 // pred_region
      _
    $region9: #{tpu_custom_call.1} parent=1 // pred_fallthru
      _
    // Predicated region
    $region10: #{tpu_custom_call.1} parent=1 // pred_check
      _
    $region11: #{tpu_custom_call.1} parent=1 // pred_check_branch
      %26 = sbr.rel (0) target = $region13
    $region12: #{tpu_custom_call.1} parent=1 // pred_region
      _
    $region13: #{tpu_custom_call.1} parent=1 // pred_fallthru
      _
    // Predicated region
    $region14: #{tpu_custom_call.1} parent=1 // pred_check
      _
    $region15: #{tpu_custom_call.1} parent=1 // pred_check_branch
      %28 = sbr.rel (0) target = $region17
    $region16: #{tpu_custom_call.1} parent=1 // pred_region
      %30 = dma.done [#allocation3], 256
    $region17: #{tpu_custom_call.1} parent=1 // pred_fallthru
      _
    %v31 = vld [vmem:[%s1] sm:$0xf]
    %v32 = vld [vmem:[%s2] sm:$0xf]
    %v33 = vld [vmem:[#allocation2] sm:$0xff]
    %35 = vst [vmem:[#allocation1] ss:$2 sm:$0xff] %v33
    %v36 = vld.sshfl [vmem:[#allocation1] sm:$0xff pattern:$0x75316420]
    %v37 = vld.sshfl [vmem:[#allocation1 + $0x8] sm:$0xff pattern:$0x75316420]
    %vm38 = vcmask 31744
    %v40 = vsel %vm38, %v31, 0
    %vm42 = vcmask 1043456
    %v43 = vsel %vm42, %v36, 0
    %v45 = vsel %vm42, %v37, 0
    %47 = vmatpush.msra.mxu0 0.0
    %48 = vmatpush.msra.mxu0 0.0
    %49 = vmatpush.msra.mxu0 0.0
    %50 = vmatpush.msra.mxu0 0.0
    %51 = vmatpush.msra.mxu0 0.0
    %52 = vmatpush.msra.mxu0 0.0
    %53 = vmatpush.msra.mxu0 0.0
    %54 = vmatpush.msra.mxu0 0.0
    %55 = vmatpush.msra.mxu0 0.0
    %56 = vmatpush.msra.mxu0 0.0
    %57 = vmatpush.msra.mxu0 0.0
    %58 = vmatpush.msra.mxu0 0.0
    %59 = vmatpush.msra.mxu0 0.0
    %60 = vmatpush.msra.mxu0 0.0
    %61 = vmatpush.msra.mxu0 0.0
    %62 = vmatpush.msra.mxu0 %v43
    %63 = vmatmul.f32.gmra.mxu0 %v40
    %v64 = vpop.f32.mrf.mxu0
    %v65 = vadd.f32 0.0, %v64
    %66 = vdwg.mxu0
    %67 = vmatpush.msra.mxu0 0.0
    %68 = vmatpush.msra.mxu0 0.0
    %69 = vmatpush.msra.mxu0 0.0
    %70 = vmatpush.msra.mxu0 0.0
    %71 = vmatpush.msra.mxu0 0.0
    %72 = vmatpush.msra.mxu0 0.0
    %73 = vmatpush.msra.mxu0 0.0
    %74 = vmatpush.msra.mxu0 0.0
    %75 = vmatpush.msra.mxu0 0.0
    %76 = vmatpush.msra.mxu0 0.0
    %77 = vmatpush.msra.mxu0 0.0
    %78 = vmatpush.msra.mxu0 0.0
    %79 = vmatpush.msra.mxu0 0.0
    %80 = vmatpush.msra.mxu0 0.0
    %81 = vmatpush.msra.mxu0 0.0
    %82 = vmatpush.msra.mxu0 %v45
    %83 = vmatmul.f32.gmra.mxu0 %v40
    %v84 = vpop.f32.mrf.mxu0
    %v85 = vadd.f32 0.0, %v84
    %86 = vdwg.mxu0
    %v89 = vrot.slane %v85, 4
    %v90 = vsel %vm42, %v65, %v89
    %v92 = vadd.f32 %v33, %v90
    %94 = vset.pattern.permute.xlu0 0
    %95 = vperm.xlu0 %94, %v32
    %v96 = vpop.permute.xlu0 %95
    %v98 = vunpack.c.l.s4 839922192
    %v99 = vunpack.c.0.s8 %v98
    %v100 = vperm.slane %v96, %v99
    %v102 = vadd.f32 %v92, %v100
    %103 = vst [vmem:[#allocation5] sm:$0xff] %v102
    %s104 = scalar_lea.vmem [#allocation2], 8
    %v105 = vld [vmem:[%s104] sm:$0xff]
    %107 = vst [vmem:[#allocation1] ss:$2 sm:$0xff] %v105
    %v108 = vld.sshfl [vmem:[#allocation1] sm:$0xff pattern:$0x75316420]
    %v109 = vld.sshfl [vmem:[#allocation1 + $0x8] sm:$0xff pattern:$0x75316420]
    %v110 = vsel %vm42, %v108, 0
    %v112 = vsel %vm42, %v109, 0
    %114 = vmatpush.msra.mxu0 0.0
    %115 = vmatpush.msra.mxu0 0.0
    %116 = vmatpush.msra.mxu0 0.0
    %117 = vmatpush.msra.mxu0 0.0
    %118 = vmatpush.msra.mxu0 0.0
    %119 = vmatpush.msra.mxu0 0.0
    %120 = vmatpush.msra.mxu0 0.0
    %121 = vmatpush.msra.mxu0 0.0
    %122 = vmatpush.msra.mxu0 0.0
    %123 = vmatpush.msra.mxu0 0.0
    %124 = vmatpush.msra.mxu0 0.0
    %125 = vmatpush.msra.mxu0 0.0
    %126 = vmatpush.msra.mxu0 0.0
    %127 = vmatpush.msra.mxu0 0.0
    %128 = vmatpush.msra.mxu0 0.0
    %129 = vmatpush.msra.mxu0 %v110
    %130 = vmatmul.f32.gmra.mxu0 %v40
    %v131 = vpop.f32.mrf.mxu0
    %v132 = vadd.f32 0.0, %v131
    %133 = vdwg.mxu0
    %134 = vmatpush.msra.mxu0 0.0
    %135 = vmatpush.msra.mxu0 0.0
    %136 = vmatpush.msra.mxu0 0.0
    %137 = vmatpush.msra.mxu0 0.0
    %138 = vmatpush.msra.mxu0 0.0
    %139 = vmatpush.msra.mxu0 0.0
    %140 = vmatpush.msra.mxu0 0.0
    %141 = vmatpush.msra.mxu0 0.0
    %142 = vmatpush.msra.mxu0 0.0
    %143 = vmatpush.msra.mxu0 0.0
    %144 = vmatpush.msra.mxu0 0.0
    %145 = vmatpush.msra.mxu0 0.0
    %146 = vmatpush.msra.mxu0 0.0
    %147 = vmatpush.msra.mxu0 0.0
    %148 = vmatpush.msra.mxu0 0.0
    %149 = vmatpush.msra.mxu0 %v112
    %150 = vmatmul.f32.gmra.mxu0 %v40
    %v151 = vpop.f32.mrf.mxu0
    %v152 = vadd.f32 0.0, %v151
    %153 = vdwg.mxu0
    %v156 = vrot.slane %v152, 4
    %v157 = vsel %vm42, %v132, %v156
    %v159 = vadd.f32 %v105, %v157
    %v160 = vadd.f32 %v159, %v100
    %s161 = scalar_lea.vmem [#allocation5], 8
    %162 = vst [vmem:[%s161] sm:$0xff] %v160
    // Predicated region
    $region18: #{tpu_custom_call.1} parent=1 // pred_check
      _
    $region19: #{tpu_custom_call.1} parent=1 // pred_check_branch
      %164 = sbr.rel (0) target = $region21
    $region20: #{tpu_custom_call.1} parent=1 // pred_region
      %166 = vsyncadd [#allocation4], 0
      %s167 = sshll.u32 [#allocation5], 4
      %s168 = int_to_ptr.vmem [resolvable:$true] %s167
      %s169 = sshll.u32 %s3, 4
      %s170 = int_to_ptr.hbm [resolvable:$true] %s169
      %175 = dma.vmem_to_hbm [thread:$0]  %s168, 256, %s170, [#allocation4], 128, 128, 8
    $region21: #{tpu_custom_call.1} parent=1 // pred_fallthru
      _
    // Predicated region
    $region22: #{tpu_custom_call.1} parent=1 // pred_check
      _
    $region23: #{tpu_custom_call.1} parent=1 // pred_check_branch
      %177 = sbr.rel (0) target = $region25
    $region24: #{tpu_custom_call.1} parent=1 // pred_region
      %179 = dma.done [#allocation4], 256
    $region25: #{tpu_custom_call.1} parent=1 // pred_fallthru
      _
    %180 = vsyncpa [#allocation3], 1
    %181 = vsyncpa [#allocation4], 1

</llo_original>
